<compile_context>
chip_gen: v7x
topology: tpu7x:2x2x1
jax: 0.10.0
libtpu: 0.0.40
codegen_flags: <defaults>
</compile_context>

<pallas_src>
import functools
import math

import jax
import jax.numpy as jnp
import numpy as np
from jax.experimental import pallas as pl
from jax.experimental.pallas import tpu as pltpu


# ---------------------------------------------------------------------------
# Pallas kernel: one (tr, tw) tile of a 2-tap inverse DWT, interleave fused.
# ---------------------------------------------------------------------------
def _idwt_kernel(ll_ref, lh_ref, hl_ref, hh_ref, out_ref, *, lo, hi):
    """out[2r+ky, 2c+kx] = ll*lo[ky]*lo[kx] + lh*hi[ky]*lo[kx]
                         + hl*lo[ky]*hi[kx] + hh*hi[ky]*hi[kx]
    computed for one tile, with the stride-2 interleave baked into the
    (2*tr, 2*tw) output block."""
    f32 = jnp.float32
    tr, tw = ll_ref.shape

    ll = ll_ref[...].astype(f32)
    lh = lh_ref[...].astype(f32)
    hl = hl_ref[...].astype(f32)
    hh = hh_ref[...].astype(f32)

    # Butterfly factorisation: fewer VALU ops, inputs die early.
    a0 = ll * lo[0] + lh * hi[0]
    a1 = ll * lo[1] + lh * hi[1]
    b0 = hl * lo[0] + hh * hi[0]
    b1 = hl * lo[1] + hh * hi[1]

    # Quadrants: te/to = even output rows (even/odd cols), be/bo = odd rows.
    te = a0 * lo[0] + b0 * hi[0]
    to = a0 * lo[1] + b0 * hi[1]
    be = a1 * lo[0] + b1 * hi[0]
    bo = a1 * lo[1] + b1 * hi[1]

    # Lane (column) interleave via constant scatter matmuls on the MXU:
    #   E[j, 2j] = 1, O[j, 2j+1] = 1   ->   (te@E + to@O)[r, 2j+kx]
    rj = jax.lax.broadcasted_iota(jnp.int32, (tw, 2 * tw), 0)
    cj = jax.lax.broadcasted_iota(jnp.int32, (tw, 2 * tw), 1)
    e_mat = (cj == 2 * rj).astype(f32)
    o_mat = (cj == 2 * rj + 1).astype(f32)

    top = (jnp.dot(te, e_mat, preferred_element_type=f32)
           + jnp.dot(to, o_mat, preferred_element_type=f32))
    bot = (jnp.dot(be, e_mat, preferred_element_type=f32)
           + jnp.dot(bo, o_mat, preferred_element_type=f32))

    # Sublane (row) interleave, same trick from the left:
    #   P0[2i, i] = 1, P1[2i+1, i] = 1
    ri = jax.lax.broadcasted_iota(jnp.int32, (2 * tr, tr), 0)
    ci = jax.lax.broadcasted_iota(jnp.int32, (2 * tr, tr), 1)
    p0 = (ri == 2 * ci).astype(f32)
    p1 = (ri == 2 * ci + 1).astype(f32)

    out = (jnp.dot(p0, top, preferred_element_type=f32)
           + jnp.dot(p1, bot, preferred_element_type=f32))
    out_ref[...] = out.astype(out_ref.dtype)


def _pick_row_tile(nh):
    """Largest multiple-of-8 tile <= 256 that divides the collapsed row axis."""
    for t in (256, 128, 64, 32, 16, 8):
        if nh % t == 0:
            return t
    return nh  # not a multiple of 8 -> single full block (still legal)


def _pick_col_tile(w):
    """Lane-dense column tile (multiple of 128) when possible, else full W."""
    if w % 128 == 0:
        return 256 if w % 256 == 0 else 128
    return w


def _idwt_level(ll, lh, hl, hh, rec_lo, rec_hi):
    """One reconstruction level. Inputs: (B, C, H, W). Output: (B, C, 2H, 2W)."""
    b, c, h, w = ll.shape
    nh = b * c * h
    dtype = ll.dtype

    lo = [float(v) for v in rec_lo]
    hi = [float(v) for v in rec_hi]
    assert len(lo) == 2 and len(hi) == 2, "kernel supports 2-tap (haar-like) filters"
    # TODO(synk): generalize to filt_len > 2 (full transposed-conv stencil plus
    # the odd-size padding-correction path of the PyTorch module).

    # Free (contiguous) reshapes: collapse (B, C, H) into one row axis.
    planes = [a.reshape(nh, w) for a in (ll, lh, hl, hh)]

    tr = _pick_row_tile(nh)
    tw = _pick_col_tile(w)
    grid = (nh // tr, w // tw)

    in_spec = pl.BlockSpec((tr, tw), lambda i, j: (i, j))
    out_spec = pl.BlockSpec((2 * tr, 2 * tw), lambda i, j: (i, j))

    itemsize = jnp.dtype(dtype).itemsize
    bytes_accessed = 8 * nh * w * itemsize            # 4 planes read + 4x area written
    flops = (16 * tw + 8 * tr + 24) * nh * w          # interleave matmuls + butterfly

    out2d = pl.pallas_call(
        functools.partial(_idwt_kernel, lo=lo, hi=hi),
        out_shape=jax.ShapeDtypeStruct((2 * nh, 2 * w), dtype),
        grid=grid,
        in_specs=[in_spec] * 4,
        out_specs=out_spec,
        compiler_params=pltpu.CompilerParams(
            dimension_semantics=("parallel", "parallel"),
            vmem_limit_bytes=48 * 1024 * 1024),
        cost_estimate=pl.CostEstimate(
            flops=int(flops), transcendentals=0,
            bytes_accessed=int(bytes_accessed)),
    )(*planes)

    # Free reshape back to NCHW: row 2*((bi*C+ci)*H+i)+ky == (bi*C+ci)*2H + 2i+ky.
    return out2d.reshape(b, c, 2 * h, 2 * w)


class IDWT:
    """JAX/Pallas port of the PyTorch IDWT module (haar, weight=None path)."""

    def __init__(self, rec_lo, rec_hi, wavelet="haar", level=1, mode="constant"):
        self.rec_lo = [float(v) for v in rec_lo]
        self.rec_hi = [float(v) for v in rec_hi]
        self.wavelet = wavelet
        self.level = level
        self.mode = mode
        self.filt_len = len(self.rec_lo)

    def __call__(self, x):
        # x = [ll, (lh, hl, hh), (lh, hl, hh), ...]  (coarse -> fine)
        l_component = x[0]
        for c_pos, comp in enumerate(x[1:]):
            lh, hl, hh = comp
            l_component = _idwt_level(l_component, lh, hl, hh,
                                      self.rec_lo, self.rec_hi)
            # Haar: (2*filt_len - 3)//2 == 0 -> no crop; odd-size correction:
            padl = padr = padt = padb = (2 * self.filt_len - 3) // 2
            if c_pos < len(x) - 2:
                if x[c_pos + 2][0].shape[-1] != l_component.shape[-1] - (padl + padr):
                    padr += 1
                if x[c_pos + 2][0].shape[-2] != l_component.shape[-2] - (padt + padb):
                    padb += 1
            if padt > 0:
                l_component = l_component[..., padt:, :]
            if padb > 0:
                l_component = l_component[..., :-padb, :]
            if padl > 0:
                l_component = l_component[..., padl:]
            if padr > 0:
                l_component = l_component[..., :-padr]
        return l_component


# ---------------------------------------------------------------------------
# Reference (vectorized conv_transpose2d(stride=2) semantics) for verification.
# ---------------------------------------------------------------------------
def _reference_idwt_level(ll, lh, hl, hh, rec_lo, rec_hi):
    lo = np.asarray(rec_lo, np.float64)
    hi = np.asarray(rec_hi, np.float64)
    subs = [np.asarray(a, np.float64) for a in (ll, lh, hl, hh)]
    filts = [np.outer(lo, lo), np.outer(hi, lo), np.outer(lo, hi), np.outer(hi, hi)]
    b, c, h, w = subs[0].shape
    flen = len(lo)
    out = np.zeros((b, c, 2 * h + flen - 2, 2 * w + flen - 2), np.float64)
    for s, f in zip(subs, filts):
        for ky in range(flen):
            for kx in range(flen):
                out[..., ky:ky + 2 * h:2, kx:kx + 2 * w:2] += s * f[ky, kx]
    return out.astype(np.float32)


if __name__ == "__main__":
    # Deterministic Haar reconstruction filters (the module's "parameters").
    inv_sqrt2 = 1.0 / math.sqrt(2.0)
    rec_lo = [inv_sqrt2, inv_sqrt2]
    rec_hi = [inv_sqrt2, -inv_sqrt2]

    idwt = IDWT(rec_lo, rec_hi, wavelet="haar", level=2)

    key = jax.random.PRNGKey(0)
    keys = jax.random.split(key, 8)

    # ---- Test 1: two-level IDWT, small shapes: 8x8 coarse + 16x16 detail -> 32x32.
    s2 = (2, 4, 8, 8)
    s1 = (2, 4, 16, 16)
    ll2 = jax.random.normal(keys[0], s2, dtype=jnp.float32)
    lh2 = jax.random.normal(keys[1], s2, dtype=jnp.float32)
    hl2 = jax.random.normal(keys[2], s2, dtype=jnp.float32)
    hh2 = jax.random.normal(keys[3], s2, dtype=jnp.float32)
    lh1 = jax.random.normal(keys[4], s1, dtype=jnp.float32)
    hl1 = jax.random.normal(keys[5], s1, dtype=jnp.float32)
    hh1 = jax.random.normal(keys[6], s1, dtype=jnp.float32)

    out = idwt([ll2, (lh2, hl2, hh2), (lh1, hl1, hh1)])
    out = jax.block_until_ready(out)
    assert out.shape == (2, 4, 32, 32), out.shape

    ref1 = _reference_idwt_level(np.asarray(ll2), np.asarray(lh2),
                                 np.asarray(hl2), np.asarray(hh2), rec_lo, rec_hi)
    ref0 = _reference_idwt_level(ref1, np.asarray(lh1), np.asarray(hl1),
                                 np.asarray(hh1), rec_lo, rec_hi)
    np.testing.assert_allclose(np.asarray(out), ref0, rtol=1e-5, atol=1e-5)

    # ---- Test 2: lane-dense, multi-step-grid single level: (2,4,64,128) -> (2,4,128,256).
    s = (2, 4, 64, 128)
    kk = jax.random.split(keys[7], 4)
    ll = jax.random.normal(kk[0], s, dtype=jnp.float32)
    lh = jax.random.normal(kk[1], s, dtype=jnp.float32)
    hl = jax.random.normal(kk[2], s, dtype=jnp.float32)
    hh = jax.random.normal(kk[3], s, dtype=jnp.float32)
    out2 = jax.block_until_ready(_idwt_level(ll, lh, hl, hh, rec_lo, rec_hi))
    assert out2.shape == (2, 4, 128, 256), out2.shape
    ref2 = _reference_idwt_level(np.asarray(ll), np.asarray(lh),
                                 np.asarray(hl), np.asarray(hh), rec_lo, rec_hi)
    np.testing.assert_allclose(np.asarray(out2), ref2, rtol=1e-5, atol=1e-5)

    print("KERNEL_OK")
</pallas_src>

<mosaic_0001>
module attributes {stable_mosaic.version = 11 : i64} {
  func.func @_idwt_kernel(%arg0: i32, %arg1: i32, %arg2: memref<64x8xf32, #tpu.memory_space<vmem>>, %arg3: memref<64x8xf32, #tpu.memory_space<vmem>>, %arg4: memref<64x8xf32, #tpu.memory_space<vmem>>, %arg5: memref<64x8xf32, #tpu.memory_space<vmem>>, %arg6: memref<128x16xf32, #tpu.memory_space<vmem>>) attributes {dimension_semantics = [#tpu.dimension_semantics<parallel>, #tpu.dimension_semantics<parallel>], iteration_bounds = array<i64: 1, 1>, scalar_prefetch = 0 : i64, scratch_operands = 0 : i64, tpu.core_type = #tpu.core_type<tc>, window_params = [{transform_indices = @transform_0, window_bounds = array<i64: 64, 8>}, {transform_indices = @transform_1, window_bounds = array<i64: 64, 8>}, {transform_indices = @transform_2, window_bounds = array<i64: 64, 8>}, {transform_indices = @transform_3, window_bounds = array<i64: 64, 8>}, {transform_indices = @transform_4, window_bounds = array<i64: 128, 16>}]} {
    %c0 = arith.constant 0 : index
    %c0_0 = arith.constant 0 : index
    %0 = vector.load %arg2[%c0, %c0_0] : memref<64x8xf32, #tpu.memory_space<vmem>>, vector<64x8xf32>
    %c0_1 = arith.constant 0 : index
    %c0_2 = arith.constant 0 : index
    %1 = vector.load %arg3[%c0_1, %c0_2] : memref<64x8xf32, #tpu.memory_space<vmem>>, vector<64x8xf32>
    %c0_3 = arith.constant 0 : index
    %c0_4 = arith.constant 0 : index
    %2 = vector.load %arg4[%c0_3, %c0_4] : memref<64x8xf32, #tpu.memory_space<vmem>>, vector<64x8xf32>
    %c0_5 = arith.constant 0 : index
    %c0_6 = arith.constant 0 : index
    %3 = vector.load %arg5[%c0_5, %c0_6] : memref<64x8xf32, #tpu.memory_space<vmem>>, vector<64x8xf32>
    %cst = arith.constant 0.707106769 : f32
    %4 = vector.broadcast %cst : f32 to vector<64x8xf32>
    %5 = arith.mulf %0, %4 : vector<64x8xf32>
    %cst_7 = arith.constant 0.707106769 : f32
    %6 = vector.broadcast %cst_7 : f32 to vector<64x8xf32>
    %7 = arith.mulf %1, %6 : vector<64x8xf32>
    %8 = arith.addf %5, %7 : vector<64x8xf32>
    %cst_8 = arith.constant 0.707106769 : f32
    %9 = vector.broadcast %cst_8 : f32 to vector<64x8xf32>
    %10 = arith.mulf %0, %9 : vector<64x8xf32>
    %cst_9 = arith.constant -0.707106769 : f32
    %11 = vector.broadcast %cst_9 : f32 to vector<64x8xf32>
    %12 = arith.mulf %1, %11 : vector<64x8xf32>
    %13 = arith.addf %10, %12 : vector<64x8xf32>
    %cst_10 = arith.constant 0.707106769 : f32
    %14 = vector.broadcast %cst_10 : f32 to vector<64x8xf32>
    %15 = arith.mulf %2, %14 : vector<64x8xf32>
    %cst_11 = arith.constant 0.707106769 : f32
    %16 = vector.broadcast %cst_11 : f32 to vector<64x8xf32>
    %17 = arith.mulf %3, %16 : vector<64x8xf32>
    %18 = arith.addf %15, %17 : vector<64x8xf32>
    %cst_12 = arith.constant 0.707106769 : f32
    %19 = vector.broadcast %cst_12 : f32 to vector<64x8xf32>
    %20 = arith.mulf %2, %19 : vector<64x8xf32>
    %cst_13 = arith.constant -0.707106769 : f32
    %21 = vector.broadcast %cst_13 : f32 to vector<64x8xf32>
    %22 = arith.mulf %3, %21 : vector<64x8xf32>
    %23 = arith.addf %20, %22 : vector<64x8xf32>
    %cst_14 = arith.constant 0.707106769 : f32
    %24 = vector.broadcast %cst_14 : f32 to vector<64x8xf32>
    %25 = arith.mulf %8, %24 : vector<64x8xf32>
    %cst_15 = arith.constant 0.707106769 : f32
    %26 = vector.broadcast %cst_15 : f32 to vector<64x8xf32>
    %27 = arith.mulf %18, %26 : vector<64x8xf32>
    %28 = arith.addf %25, %27 : vector<64x8xf32>
    %cst_16 = arith.constant 0.707106769 : f32
    %29 = vector.broadcast %cst_16 : f32 to vector<64x8xf32>
    %30 = arith.mulf %8, %29 : vector<64x8xf32>
    %cst_17 = arith.constant -0.707106769 : f32
    %31 = vector.broadcast %cst_17 : f32 to vector<64x8xf32>
    %32 = arith.mulf %18, %31 : vector<64x8xf32>
    %33 = arith.addf %30, %32 : vector<64x8xf32>
    %cst_18 = arith.constant 0.707106769 : f32
    %34 = vector.broadcast %cst_18 : f32 to vector<64x8xf32>
    %35 = arith.mulf %13, %34 : vector<64x8xf32>
    %cst_19 = arith.constant 0.707106769 : f32
    %36 = vector.broadcast %cst_19 : f32 to vector<64x8xf32>
    %37 = arith.mulf %23, %36 : vector<64x8xf32>
    %38 = arith.addf %35, %37 : vector<64x8xf32>
    %cst_20 = arith.constant 0.707106769 : f32
    %39 = vector.broadcast %cst_20 : f32 to vector<64x8xf32>
    %40 = arith.mulf %13, %39 : vector<64x8xf32>
    %cst_21 = arith.constant -0.707106769 : f32
    %41 = vector.broadcast %cst_21 : f32 to vector<64x8xf32>
    %42 = arith.mulf %23, %41 : vector<64x8xf32>
    %43 = arith.addf %40, %42 : vector<64x8xf32>
    %44 = tpu.iota {dimensions = array<i32: 0>} : vector<8x16xi32>
    %45 = tpu.iota {dimensions = array<i32: 1>} : vector<8x16xi32>
    %c2_i32 = arith.constant 2 : i32
    %46 = vector.broadcast %c2_i32 : i32 to vector<8x16xi32>
    %47 = arith.muli %46, %44 : vector<8x16xi32>
    %48 = arith.cmpi eq, %45, %47 : vector<8x16xi32>
    %49 = arith.extui %48 : vector<8x16xi1> to vector<8x16xi32>
    %50 = arith.sitofp %49 : vector<8x16xi32> to vector<8x16xf32>
    %c2_i32_22 = arith.constant 2 : i32
    %51 = vector.broadcast %c2_i32_22 : i32 to vector<8x16xi32>
    %52 = arith.muli %51, %44 : vector<8x16xi32>
    %c1_i32 = arith.constant 1 : i32
    %53 = vector.broadcast %c1_i32 : i32 to vector<8x16xi32>
    %54 = arith.addi %52, %53 : vector<8x16xi32>
    %55 = arith.cmpi eq, %45, %54 : vector<8x16xi32>
    %56 = arith.extui %55 : vector<8x16xi1> to vector<8x16xi32>
    %57 = arith.sitofp %56 : vector<8x16xi32> to vector<8x16xf32>
    %cst_23 = arith.constant dense<0.000000e+00> : vector<64x16xf32>
    %58 = tpu.matmul %28, %50, %cst_23 {dimension_numbers = #tpu.dot_dimension_numbers<[1], [0], [0], [1], [0, 0, 1, 1], [], []>} : vector<64x8xf32>, vector<8x16xf32>, vector<64x16xf32> -> vector<64x16xf32>
    %cst_24 = arith.constant dense<0.000000e+00> : vector<64x16xf32>
    %59 = tpu.matmul %33, %57, %cst_24 {dimension_numbers = #tpu.dot_dimension_numbers<[1], [0], [0], [1], [0, 0, 1, 1], [], []>} : vector<64x8xf32>, vector<8x16xf32>, vector<64x16xf32> -> vector<64x16xf32>
    %60 = arith.addf %58, %59 : vector<64x16xf32>
    %cst_25 = arith.constant dense<0.000000e+00> : vector<64x16xf32>
    %61 = tpu.matmul %38, %50, %cst_25 {dimension_numbers = #tpu.dot_dimension_numbers<[1], [0], [0], [1], [0, 0, 1, 1], [], []>} : vector<64x8xf32>, vector<8x16xf32>, vector<64x16xf32> -> vector<64x16xf32>
    %cst_26 = arith.constant dense<0.000000e+00> : vector<64x16xf32>
    %62 = tpu.matmul %43, %57, %cst_26 {dimension_numbers = #tpu.dot_dimension_numbers<[1], [0], [0], [1], [0, 0, 1, 1], [], []>} : vector<64x8xf32>, vector<8x16xf32>, vector<64x16xf32> -> vector<64x16xf32>
    %63 = arith.addf %61, %62 : vector<64x16xf32>
    %64 = tpu.iota {dimensions = array<i32: 0>} : vector<128x64xi32>
    %65 = tpu.iota {dimensions = array<i32: 1>} : vector<128x64xi32>
    %c2_i32_27 = arith.constant 2 : i32
    %66 = vector.broadcast %c2_i32_27 : i32 to vector<128x64xi32>
    %67 = arith.muli %66, %65 : vector<128x64xi32>
    %68 = arith.cmpi eq, %64, %67 : vector<128x64xi32>
    %69 = arith.extui %68 : vector<128x64xi1> to vector<128x64xi32>
    %70 = arith.sitofp %69 : vector<128x64xi32> to vector<128x64xf32>
    %c2_i32_28 = arith.constant 2 : i32
    %71 = vector.broadcast %c2_i32_28 : i32 to vector<128x64xi32>
    %72 = arith.muli %71, %65 : vector<128x64xi32>
    %c1_i32_29 = arith.constant 1 : i32
    %73 = vector.broadcast %c1_i32_29 : i32 to vector<128x64xi32>
    %74 = arith.addi %72, %73 : vector<128x64xi32>
    %75 = arith.cmpi eq, %64, %74 : vector<128x64xi32>
    %76 = arith.extui %75 : vector<128x64xi1> to vector<128x64xi32>
    %77 = arith.sitofp %76 : vector<128x64xi32> to vector<128x64xf32>
    %cst_30 = arith.constant dense<0.000000e+00> : vector<128x16xf32>
    %78 = tpu.matmul %70, %60, %cst_30 {dimension_numbers = #tpu.dot_dimension_numbers<[1], [0], [0], [1], [0, 0, 1, 1], [], []>} : vector<128x64xf32>, vector<64x16xf32>, vector<128x16xf32> -> vector<128x16xf32>
    %cst_31 = arith.constant dense<0.000000e+00> : vector<128x16xf32>
    %79 = tpu.matmul %77, %63, %cst_31 {dimension_numbers = #tpu.dot_dimension_numbers<[1], [0], [0], [1], [0, 0, 1, 1], [], []>} : vector<128x64xf32>, vector<64x16xf32>, vector<128x16xf32> -> vector<128x16xf32>
    %80 = arith.addf %78, %79 : vector<128x16xf32>
    %c0_32 = arith.constant 0 : index
    %c0_33 = arith.constant 0 : index
    %81 = vector.load %arg6[%c0_32, %c0_33] : memref<128x16xf32, #tpu.memory_space<vmem>>, vector<128x16xf32>
    tpu.vector_store %arg6[%c0_32, %c0_33], %80 {strides = array<i32>} : memref<128x16xf32, #tpu.memory_space<vmem>>, vector<128x16xf32>,
    return
  }
  func.func @transform_0(%arg0: i32, %arg1: i32) -> (i32, i32) {
    %c0_i32 = arith.constant 0 : i32
    return %arg0, %arg1 : i32, i32
  }
  func.func @transform_1(%arg0: i32, %arg1: i32) -> (i32, i32) {
    %c0_i32 = arith.constant 0 : i32
    return %arg0, %arg1 : i32, i32
  }
  func.func @transform_2(%arg0: i32, %arg1: i32) -> (i32, i32) {
    %c0_i32 = arith.constant 0 : i32
    return %arg0, %arg1 : i32, i32
  }
  func.func @transform_3(%arg0: i32, %arg1: i32) -> (i32, i32) {
    %c0_i32 = arith.constant 0 : i32
    return %arg0, %arg1 : i32, i32
  }
  func.func @transform_4(%arg0: i32, %arg1: i32) -> (i32, i32) {
    %c0_i32 = arith.constant 0 : i32
    return %arg0, %arg1 : i32, i32
  }
}

</mosaic_0001>

<llo_original>
// kernel: tpu_custom_call.1
$region0: #{tpu_custom_call.1}
  #allocation0 [shape = 'u32[]', space=smem, size = 0x4, offset = 0x4, fixed_abs, tag = 'smem constant byte address 0x4 - core index']
  #allocation1 [shape = 'u32[144,128]{1,0:T(1,128)}', space=vmem, size = 0x12000, scoped, tag = 'internal scratch']
  %s0 = inlined_call_operand.vmem [shape: f32[64,8], index: 0, kind: input, shape index: {}]
  %s1 = inlined_call_operand.vmem [shape: f32[64,8], index: 1, kind: input, shape index: {}]
  %s2 = inlined_call_operand.vmem [shape: f32[64,8], index: 2, kind: input, shape index: {}]
  %s3 = inlined_call_operand.vmem [shape: f32[64,8], index: 3, kind: input, shape index: {}]
  %s4 = inlined_call_operand.vmem [shape: f32[128,16], index: 4, kind: output, shape index: {}]
  %s5 = sld [smem:[#allocation0]]
  $region26: #{tpu_custom_call.1} parent=0
    _
  %s7 = ssub.s32 1, %s5
  %s8 = scalar_select 0, %s7, %s5
  // Predicated region
  $region2: #{tpu_custom_call.1} parent=0 // pred_check
    _
  $region3: #{tpu_custom_call.1} parent=0 // pred_check_branch
    %10 = sbr.rel (0) target = $region5
  $region4: #{tpu_custom_call.1} parent=0 // pred_region
    _
  $region5: #{tpu_custom_call.1} parent=0 // pred_fallthru
    _
  // Predicated region
  $region6: #{tpu_custom_call.1} parent=0 // pred_check
    _
  $region7: #{tpu_custom_call.1} parent=0 // pred_check_branch
    %12 = sbr.rel (0) target = $region9
  $region8: #{tpu_custom_call.1} parent=0 // pred_region
    _
  $region9: #{tpu_custom_call.1} parent=0 // pred_fallthru
    _
  // Predicated region
  $region10: #{tpu_custom_call.1} parent=0 // pred_check
    _
  $region11: #{tpu_custom_call.1} parent=0 // pred_check_branch
    %14 = sbr.rel (0) target = $region13
  $region12: #{tpu_custom_call.1} parent=0 // pred_region
    _
  $region13: #{tpu_custom_call.1} parent=0 // pred_fallthru
    _
  // Predicated region
  $region14: #{tpu_custom_call.1} parent=0 // pred_check
    _
  $region15: #{tpu_custom_call.1} parent=0 // pred_check_branch
    %16 = sbr.rel (0) target = $region17
  $region16: #{tpu_custom_call.1} parent=0 // pred_region
    _
  $region17: #{tpu_custom_call.1} parent=0 // pred_fallthru
    _
  %v17 = vld [vmem:[%s0] sm:$0xff]
  %v18 = vld [vmem:[%s0 + $0x8] sm:$0xff]
  %v19 = vld [vmem:[%s0 + $0x10] sm:$0xff]
  %v20 = vld [vmem:[%s0 + $0x18] sm:$0xff]
  %v21 = vld [vmem:[%s0 + $0x20] sm:$0xff]
  %v22 = vld [vmem:[%s0 + $0x28] sm:$0xff]
  %v23 = vld [vmem:[%s0 + $0x30] sm:$0xff]
  %v24 = vld [vmem:[%s0 + $0x38] sm:$0xff]
  %v25 = vld [vmem:[%s1] sm:$0xff]
  %v26 = vld [vmem:[%s1 + $0x8] sm:$0xff]
  %v27 = vld [vmem:[%s1 + $0x10] sm:$0xff]
  %v28 = vld [vmem:[%s1 + $0x18] sm:$0xff]
  %v29 = vld [vmem:[%s1 + $0x20] sm:$0xff]
  %v30 = vld [vmem:[%s1 + $0x28] sm:$0xff]
  %v31 = vld [vmem:[%s1 + $0x30] sm:$0xff]
  %v32 = vld [vmem:[%s1 + $0x38] sm:$0xff]
  %v33 = vld [vmem:[%s2] sm:$0xff]
  %v34 = vld [vmem:[%s2 + $0x8] sm:$0xff]
  %v35 = vld [vmem:[%s2 + $0x10] sm:$0xff]
  %v36 = vld [vmem:[%s2 + $0x18] sm:$0xff]
  %v37 = vld [vmem:[%s2 + $0x20] sm:$0xff]
  %v38 = vld [vmem:[%s2 + $0x28] sm:$0xff]
  %v39 = vld [vmem:[%s2 + $0x30] sm:$0xff]
  %v40 = vld [vmem:[%s2 + $0x38] sm:$0xff]
  %v41 = vld [vmem:[%s3] sm:$0xff]
  %v42 = vld [vmem:[%s3 + $0x8] sm:$0xff]
  %v43 = vld [vmem:[%s3 + $0x10] sm:$0xff]
  %v44 = vld [vmem:[%s3 + $0x18] sm:$0xff]
  %v45 = vld [vmem:[%s3 + $0x20] sm:$0xff]
  %v46 = vld [vmem:[%s3 + $0x28] sm:$0xff]
  %v47 = vld [vmem:[%s3 + $0x30] sm:$0xff]
  %v48 = vld [vmem:[%s3 + $0x38] sm:$0xff]
  %v49 = vmul.f32 %v17, 0.70710677
  %v50 = vmul.f32 %v18, 0.70710677
  %v51 = vmul.f32 %v19, 0.70710677
  %v52 = vmul.f32 %v20, 0.70710677
  %v53 = vmul.f32 %v21, 0.70710677
  %v54 = vmul.f32 %v22, 0.70710677
  %v55 = vmul.f32 %v23, 0.70710677
  %v56 = vmul.f32 %v24, 0.70710677
  %v57 = vmul.f32 %v25, 0.70710677
  %v58 = vmul.f32 %v26, 0.70710677
  %v59 = vmul.f32 %v27, 0.70710677
  %v60 = vmul.f32 %v28, 0.70710677
  %v61 = vmul.f32 %v29, 0.70710677
  %v62 = vmul.f32 %v30, 0.70710677
  %v63 = vmul.f32 %v31, 0.70710677
  %v64 = vmul.f32 %v32, 0.70710677
  %v65 = vadd.f32 %v49, %v57
  %v66 = vadd.f32 %v50, %v58
  %v67 = vadd.f32 %v51, %v59
  %v68 = vadd.f32 %v52, %v60
  %v69 = vadd.f32 %v53, %v61
  %v70 = vadd.f32 %v54, %v62
  %v71 = vadd.f32 %v55, %v63
  %v72 = vadd.f32 %v56, %v64
  %v73 = vmul.f32 %v25, -0.70710677
  %v74 = vmul.f32 %v26, -0.70710677
  %v75 = vmul.f32 %v27, -0.70710677
  %v76 = vmul.f32 %v28, -0.70710677
  %v77 = vmul.f32 %v29, -0.70710677
  %v78 = vmul.f32 %v30, -0.70710677
  %v79 = vmul.f32 %v31, -0.70710677
  %v80 = vmul.f32 %v32, -0.70710677
  %v81 = vadd.f32 %v49, %v73
  %v82 = vadd.f32 %v50, %v74
  %v83 = vadd.f32 %v51, %v75
  %v84 = vadd.f32 %v52, %v76
  %v85 = vadd.f32 %v53, %v77
  %v86 = vadd.f32 %v54, %v78
  %v87 = vadd.f32 %v55, %v79
  %v88 = vadd.f32 %v56, %v80
  %v89 = vmul.f32 %v33, 0.70710677
  %v90 = vmul.f32 %v34, 0.70710677
  %v91 = vmul.f32 %v35, 0.70710677
  %v92 = vmul.f32 %v36, 0.70710677
  %v93 = vmul.f32 %v37, 0.70710677
  %v94 = vmul.f32 %v38, 0.70710677
  %v95 = vmul.f32 %v39, 0.70710677
  %v96 = vmul.f32 %v40, 0.70710677
  %v97 = vmul.f32 %v41, 0.70710677
  %v98 = vmul.f32 %v42, 0.70710677
  %v99 = vmul.f32 %v43, 0.70710677
  %v100 = vmul.f32 %v44, 0.70710677
  %v101 = vmul.f32 %v45, 0.70710677
  %v102 = vmul.f32 %v46, 0.70710677
  %v103 = vmul.f32 %v47, 0.70710677
  %v104 = vmul.f32 %v48, 0.70710677
  %v105 = vadd.f32 %v89, %v97
  %v106 = vadd.f32 %v90, %v98
  %v107 = vadd.f32 %v91, %v99
  %v108 = vadd.f32 %v92, %v100
  %v109 = vadd.f32 %v93, %v101
  %v110 = vadd.f32 %v94, %v102
  %v111 = vadd.f32 %v95, %v103
  %v112 = vadd.f32 %v96, %v104
  %v113 = vmul.f32 %v41, -0.70710677
  %v114 = vmul.f32 %v42, -0.70710677
  %v115 = vmul.f32 %v43, -0.70710677
  %v116 = vmul.f32 %v44, -0.70710677
  %v117 = vmul.f32 %v45, -0.70710677
  %v118 = vmul.f32 %v46, -0.70710677
  %v119 = vmul.f32 %v47, -0.70710677
  %v120 = vmul.f32 %v48, -0.70710677
  %v121 = vadd.f32 %v89, %v113
  %v122 = vadd.f32 %v90, %v114
  %v123 = vadd.f32 %v91, %v115
  %v124 = vadd.f32 %v92, %v116
  %v125 = vadd.f32 %v93, %v117
  %v126 = vadd.f32 %v94, %v118
  %v127 = vadd.f32 %v95, %v119
  %v128 = vadd.f32 %v96, %v120
  %v129 = vmul.f32 %v65, 0.70710677
  %v130 = vmul.f32 %v66, 0.70710677
  %v131 = vmul.f32 %v67, 0.70710677
  %v132 = vmul.f32 %v68, 0.70710677
  %v133 = vmul.f32 %v69, 0.70710677
  %v134 = vmul.f32 %v70, 0.70710677
  %v135 = vmul.f32 %v71, 0.70710677
  %v136 = vmul.f32 %v72, 0.70710677
  %v137 = vmul.f32 %v105, 0.70710677
  %v138 = vmul.f32 %v106, 0.70710677
  %v139 = vmul.f32 %v107, 0.70710677
  %v140 = vmul.f32 %v108, 0.70710677
  %v141 = vmul.f32 %v109, 0.70710677
  %v142 = vmul.f32 %v110, 0.70710677
  %v143 = vmul.f32 %v111, 0.70710677
  %v144 = vmul.f32 %v112, 0.70710677
  %v145 = vadd.f32 %v129, %v137
  %v146 = vadd.f32 %v130, %v138
  %v147 = vadd.f32 %v131, %v139
  %v148 = vadd.f32 %v132, %v140
  %v149 = vadd.f32 %v133, %v141
  %v150 = vadd.f32 %v134, %v142
  %v151 = vadd.f32 %v135, %v143
  %v152 = vadd.f32 %v136, %v144
  %v153 = vmul.f32 %v105, -0.70710677
  %v154 = vmul.f32 %v106, -0.70710677
  %v155 = vmul.f32 %v107, -0.70710677
  %v156 = vmul.f32 %v108, -0.70710677
  %v157 = vmul.f32 %v109, -0.70710677
  %v158 = vmul.f32 %v110, -0.70710677
  %v159 = vmul.f32 %v111, -0.70710677
  %v160 = vmul.f32 %v112, -0.70710677
  %v161 = vadd.f32 %v129, %v153
  %v162 = vadd.f32 %v130, %v154
  %v163 = vadd.f32 %v131, %v155
  %v164 = vadd.f32 %v132, %v156
  %v165 = vadd.f32 %v133, %v157
  %v166 = vadd.f32 %v134, %v158
  %v167 = vadd.f32 %v135, %v159
  %v168 = vadd.f32 %v136, %v160
  %v169 = vmul.f32 %v81, 0.70710677
  %v170 = vmul.f32 %v82, 0.70710677
  %v171 = vmul.f32 %v83, 0.70710677
  %v172 = vmul.f32 %v84, 0.70710677
  %v173 = vmul.f32 %v85, 0.70710677
  %v174 = vmul.f32 %v86, 0.70710677
  %v175 = vmul.f32 %v87, 0.70710677
  %v176 = vmul.f32 %v88, 0.70710677
  %v177 = vmul.f32 %v121, 0.70710677
  %v178 = vmul.f32 %v122, 0.70710677
  %v179 = vmul.f32 %v123, 0.70710677
  %v180 = vmul.f32 %v124, 0.70710677
  %v181 = vmul.f32 %v125, 0.70710677
  %v182 = vmul.f32 %v126, 0.70710677
  %v183 = vmul.f32 %v127, 0.70710677
  %v184 = vmul.f32 %v128, 0.70710677
  %v185 = vadd.f32 %v169, %v177
  %v186 = vadd.f32 %v170, %v178
  %v187 = vadd.f32 %v171, %v179
  %v188 = vadd.f32 %v172, %v180
  %v189 = vadd.f32 %v173, %v181
  %v190 = vadd.f32 %v174, %v182
  %v191 = vadd.f32 %v175, %v183
  %v192 = vadd.f32 %v176, %v184
  %v193 = vmul.f32 %v121, -0.70710677
  %v194 = vmul.f32 %v122, -0.70710677
  %v195 = vmul.f32 %v123, -0.70710677
  %v196 = vmul.f32 %v124, -0.70710677
  %v197 = vmul.f32 %v125, -0.70710677
  %v198 = vmul.f32 %v126, -0.70710677
  %v199 = vmul.f32 %v127, -0.70710677
  %v200 = vmul.f32 %v128, -0.70710677
  %v201 = vadd.f32 %v169, %v193
  %v202 = vadd.f32 %v170, %v194
  %v203 = vadd.f32 %v171, %v195
  %v204 = vadd.f32 %v172, %v196
  %v205 = vadd.f32 %v173, %v197
  %v206 = vadd.f32 %v174, %v198
  %v207 = vadd.f32 %v175, %v199
  %v208 = vadd.f32 %v176, %v200
  %v209 = vlaneseq
  %v210 = vshrl.u32 %v209, 7
  %v211 = vlaneseq
  %v212 = vand.u32 %v211, 127
  %v213 = vmul.u32 %v210, 2
  %vm214 = vcmp.eq.s32.totalorder %v212, %v213
  %v215 = vsel %vm214, 1, 0
  %v216 = vcvt.s32.f32 %v215
  %v217 = vadd.s32 %v213, 1
  %vm218 = vcmp.eq.s32.totalorder %v212, %v217
  %v219 = vsel %vm218, 1, 0
  %v220 = vcvt.s32.f32 %v219
  %vm221 = vcmask 64512
  %v223 = vsel %vm221, %v161, 0
  %v226 = vsel %vm221, %v162, 0
  %v229 = vsel %vm221, %v163, 0
  %v232 = vsel %vm221, %v164, 0
  %v235 = vsel %vm221, %v165, 0
  %v238 = vsel %vm221, %v166, 0
  %v241 = vsel %vm221, %v167, 0
  %v244 = vsel %vm221, %v168, 0
  %246 = vmatprep.subr.mxu0 0.0
  %247 = vmatpush1.msra.mxu0 %v220
  %248 = vmatprep.subr.mxu0 0.0
  %249 = vmatpush1.msra.mxu0 0.0
  %250 = vmatprep.subr.mxu0 0.0
  %251 = vmatpush1.msra.mxu0 0.0
  %252 = vmatprep.subr.mxu0 0.0
  %253 = vmatpush1.msra.mxu0 0.0
  %254 = vmatprep.subr.mxu0 0.0
  %255 = vmatpush1.msra.mxu0 0.0
  %256 = vmatprep.subr.mxu0 0.0
  %257 = vmatpush1.msra.mxu0 0.0
  %258 = vmatprep.subr.mxu0 0.0
  %259 = vmatpush1.msra.mxu0 0.0
  %260 = vmatprep.subr.mxu0 0.0
  %261 = vmatpush1.msra.mxu0 0.0
  %262 = vmatprep.subr.mxu0 0.0
  %263 = vmatpush1.msra.mxu0 0.0
  %264 = vmatprep.subr.mxu0 0.0
  %265 = vmatpush1.msra.mxu0 0.0
  %266 = vmatprep.subr.mxu0 0.0
  %267 = vmatpush1.msra.mxu0 0.0
  %268 = vmatprep.subr.mxu0 0.0
  %269 = vmatpush1.msra.mxu0 0.0
  %270 = vmatprep.subr.mxu0 0.0
  %271 = vmatpush1.msra.mxu0 0.0
  %272 = vmatprep.subr.mxu0 0.0
  %273 = vmatpush1.msra.mxu0 0.0
  %274 = vmatprep.subr.mxu0 0.0
  %275 = vmatpush1.msra.mxu0 0.0
  %276 = vmatprep.subr.mxu0 0.0
  %277 = vmatpush1.msra.mxu0 0.0
  %278 = vmatprep.subr.mxu0 0.0
  %279 = vmatpush1.msra.mxu0 0.0
  %280 = vmatprep.subr.mxu0 0.0
  %281 = vmatpush1.msra.mxu0 0.0
  %282 = vmatprep.subr.mxu0 0.0
  %283 = vmatpush1.msra.mxu0 0.0
  %284 = vmatprep.subr.mxu0 0.0
  %285 = vmatpush1.msra.mxu0 0.0
  %286 = vmatprep.subr.mxu0 0.0
  %287 = vmatpush1.msra.mxu0 0.0
  %288 = vmatprep.subr.mxu0 0.0
  %289 = vmatpush1.msra.mxu0 0.0
  %290 = vmatprep.subr.mxu0 0.0
  %291 = vmatpush1.msra.mxu0 0.0
  %292 = vmatprep.subr.mxu0 0.0
  %293 = vmatpush1.msra.mxu0 0.0
  %294 = vmatprep.subr.mxu0 0.0
  %295 = vmatpush1.msra.mxu0 0.0
  %296 = vmatprep.subr.mxu0 0.0
  %297 = vmatpush1.msra.mxu0 0.0
  %298 = vmatprep.subr.mxu0 0.0
  %299 = vmatpush1.msra.mxu0 0.0
  %300 = vmatprep.subr.mxu0 0.0
  %301 = vmatpush1.msra.mxu0 0.0
  %302 = vmatprep.subr.mxu0 0.0
  %303 = vmatpush1.msra.mxu0 0.0
  %304 = vmatprep.subr.mxu0 0.0
  %305 = vmatpush1.msra.mxu0 0.0
  %306 = vmatprep.subr.mxu0 0.0
  %307 = vmatpush1.msra.mxu0 0.0
  %308 = vmatprep.subr.mxu0 0.0
  %309 = vmatpush1.msra.mxu0 0.0
  %310 = vmatprep.mubr.f32.mxu0 0.0
  %311 = vmatmul.mubr.f32.gmra.mrb[0].mxu0 %v223
  %v312 = vpop.f32.mrb[0].mxu0
  %v313 = vadd.f32 0.0, %v312
  %v314 = vpop.f32.mrb[0].mxu0
  %315 = vmatprep.mubr.f32.mxu0 0.0
  %316 = vmatmul.mubr.f32.gmra.mrb[0].mxu0 %v226
  %v317 = vpop.f32.mrb[0].mxu0
  %v318 = vadd.f32 0.0, %v317
  %v319 = vpop.f32.mrb[0].mxu0
  %320 = vmatprep.mubr.f32.mxu0 0.0
  %321 = vmatmul.mubr.f32.gmra.mrb[0].mxu0 %v229
  %v322 = vpop.f32.mrb[0].mxu0
  %v323 = vadd.f32 0.0, %v322
  %v324 = vpop.f32.mrb[0].mxu0
  %325 = vmatprep.mubr.f32.mxu0 0.0
  %326 = vmatmul.mubr.f32.gmra.mrb[0].mxu0 %v232
  %v327 = vpop.f32.mrb[0].mxu0
  %v328 = vadd.f32 0.0, %v327
  %v329 = vpop.f32.mrb[0].mxu0
  %330 = vmatprep.mubr.f32.mxu0 0.0
  %331 = vmatmul.mubr.f32.gmra.mrb[0].mxu0 %v235
  %v332 = vpop.f32.mrb[0].mxu0
  %v333 = vadd.f32 0.0, %v332
  %v334 = vpop.f32.mrb[0].mxu0
  %335 = vmatprep.mubr.f32.mxu0 0.0
  %336 = vmatmul.mubr.f32.gmra.mrb[0].mxu0 %v238
  %v337 = vpop.f32.mrb[0].mxu0
  %v338 = vadd.f32 0.0, %v337
  %v339 = vpop.f32.mrb[0].mxu0
  %340 = vmatprep.mubr.f32.mxu0 0.0
  %341 = vmatmul.mubr.f32.gmra.mrb[0].mxu0 %v241
  %v342 = vpop.f32.mrb[0].mxu0
  %v343 = vadd.f32 0.0, %v342
  %v344 = vpop.f32.mrb[0].mxu0
  %345 = vmatprep.mubr.f32.mxu0 0.0
  %346 = vmatmul.mubr.f32.gmra.mrb[0].mxu0 %v244
  %v347 = vpop.f32.mrb[0].mxu0
  %v348 = vadd.f32 0.0, %v347
  %v349 = vpop.f32.mrb[0].mxu0
  %350 = vdwg.mxu0
  %v352 = vsel %vm221, %v145, 0
  %v355 = vsel %vm221, %v146, 0
  %v358 = vsel %vm221, %v147, 0
  %v361 = vsel %vm221, %v148, 0
  %v364 = vsel %vm221, %v149, 0
  %v367 = vsel %vm221, %v150, 0
  %v370 = vsel %vm221, %v151, 0
  %v373 = vsel %vm221, %v152, 0
  %375 = vmatprep.subr.mxu0 0.0
  %376 = vmatpush1.msra.mxu0 %v216
  %377 = vmatprep.subr.mxu0 0.0
  %378 = vmatpush1.msra.mxu0 0.0
  %379 = vmatprep.subr.mxu0 0.0
  %380 = vmatpush1.msra.mxu0 0.0
  %381 = vmatprep.subr.mxu0 0.0
  %382 = vmatpush1.msra.mxu0 0.0
  %383 = vmatprep.subr.mxu0 0.0
  %384 = vmatpush1.msra.mxu0 0.0
  %385 = vmatprep.subr.mxu0 0.0
  %386 = vmatpush1.msra.mxu0 0.0
  %387 = vmatprep.subr.mxu0 0.0
  %388 = vmatpush1.msra.mxu0 0.0
  %389 = vmatprep.subr.mxu0 0.0
  %390 = vmatpush1.msra.mxu0 0.0
  %391 = vmatprep.subr.mxu0 0.0
  %392 = vmatpush1.msra.mxu0 0.0
  %393 = vmatprep.subr.mxu0 0.0
  %394 = vmatpush1.msra.mxu0 0.0
  %395 = vmatprep.subr.mxu0 0.0
  %396 = vmatpush1.msra.mxu0 0.0
  %397 = vmatprep.subr.mxu0 0.0
  %398 = vmatpush1.msra.mxu0 0.0
  %399 = vmatprep.subr.mxu0 0.0
  %400 = vmatpush1.msra.mxu0 0.0
  %401 = vmatprep.subr.mxu0 0.0
  %402 = vmatpush1.msra.mxu0 0.0
  %403 = vmatprep.subr.mxu0 0.0
  %404 = vmatpush1.msra.mxu0 0.0
  %405 = vmatprep.subr.mxu0 0.0
  %406 = vmatpush1.msra.mxu0 0.0
  %407 = vmatprep.subr.mxu0 0.0
  %408 = vmatpush1.msra.mxu0 0.0
  %409 = vmatprep.subr.mxu0 0.0
  %410 = vmatpush1.msra.mxu0 0.0
  %411 = vmatprep.subr.mxu0 0.0
  %412 = vmatpush1.msra.mxu0 0.0
  %413 = vmatprep.subr.mxu0 0.0
  %414 = vmatpush1.msra.mxu0 0.0
  %415 = vmatprep.subr.mxu0 0.0
  %416 = vmatpush1.msra.mxu0 0.0
  %417 = vmatprep.subr.mxu0 0.0
  %418 = vmatpush1.msra.mxu0 0.0
  %419 = vmatprep.subr.mxu0 0.0
  %420 = vmatpush1.msra.mxu0 0.0
  %421 = vmatprep.subr.mxu0 0.0
  %422 = vmatpush1.msra.mxu0 0.0
  %423 = vmatprep.subr.mxu0 0.0
  %424 = vmatpush1.msra.mxu0 0.0
  %425 = vmatprep.subr.mxu0 0.0
  %426 = vmatpush1.msra.mxu0 0.0
  %427 = vmatprep.subr.mxu0 0.0
  %428 = vmatpush1.msra.mxu0 0.0
  %429 = vmatprep.subr.mxu0 0.0
  %430 = vmatpush1.msra.mxu0 0.0
  %431 = vmatprep.subr.mxu0 0.0
  %432 = vmatpush1.msra.mxu0 0.0
  %433 = vmatprep.subr.mxu0 0.0
  %434 = vmatpush1.msra.mxu0 0.0
  %435 = vmatprep.subr.mxu0 0.0
  %436 = vmatpush1.msra.mxu0 0.0
  %437 = vmatprep.subr.mxu0 0.0
  %438 = vmatpush1.msra.mxu0 0.0
  %439 = vmatprep.mubr.f32.mxu0 0.0
  %440 = vmatmul.mubr.f32.gmra.mrb[0].mxu0 %v352
  %v441 = vpop.f32.mrb[0].mxu0
  %v442 = vadd.f32 %v313, %v441
  %v443 = vpop.f32.mrb[0].mxu0
  %444 = vmatprep.mubr.f32.mxu0 0.0
  %445 = vmatmul.mubr.f32.gmra.mrb[0].mxu0 %v355
  %v446 = vpop.f32.mrb[0].mxu0
  %v447 = vadd.f32 %v318, %v446
  %v448 = vpop.f32.mrb[0].mxu0
  %449 = vmatprep.mubr.f32.mxu0 0.0
  %450 = vmatmul.mubr.f32.gmra.mrb[0].mxu0 %v358
  %v451 = vpop.f32.mrb[0].mxu0
  %v452 = vadd.f32 %v323, %v451
  %v453 = vpop.f32.mrb[0].mxu0
  %454 = vmatprep.mubr.f32.mxu0 0.0
  %455 = vmatmul.mubr.f32.gmra.mrb[0].mxu0 %v361
  %v456 = vpop.f32.mrb[0].mxu0
  %v457 = vadd.f32 %v328, %v456
  %v458 = vpop.f32.mrb[0].mxu0
  %459 = vmatprep.mubr.f32.mxu0 0.0
  %460 = vmatmul.mubr.f32.gmra.mrb[0].mxu0 %v364
  %v461 = vpop.f32.mrb[0].mxu0
  %v462 = vadd.f32 %v333, %v461
  %v463 = vpop.f32.mrb[0].mxu0
  %464 = vmatprep.mubr.f32.mxu0 0.0
  %465 = vmatmul.mubr.f32.gmra.mrb[0].mxu0 %v367
  %v466 = vpop.f32.mrb[0].mxu0
  %v467 = vadd.f32 %v338, %v466
  %v468 = vpop.f32.mrb[0].mxu0
  %469 = vmatprep.mubr.f32.mxu0 0.0
  %470 = vmatmul.mubr.f32.gmra.mrb[0].mxu0 %v370
  %v471 = vpop.f32.mrb[0].mxu0
  %v472 = vadd.f32 %v343, %v471
  %v473 = vpop.f32.mrb[0].mxu0
  %474 = vmatprep.mubr.f32.mxu0 0.0
  %475 = vmatmul.mubr.f32.gmra.mrb[0].mxu0 %v373
  %v476 = vpop.f32.mrb[0].mxu0
  %v477 = vadd.f32 %v348, %v476
  %v478 = vpop.f32.mrb[0].mxu0
  %479 = vdwg.mxu0
  %v481 = vsel %vm221, %v201, 0
  %v484 = vsel %vm221, %v202, 0
  %v487 = vsel %vm221, %v203, 0
  %v490 = vsel %vm221, %v204, 0
  %v493 = vsel %vm221, %v205, 0
  %v496 = vsel %vm221, %v206, 0
  %v499 = vsel %vm221, %v207, 0
  %v502 = vsel %vm221, %v208, 0
  %504 = vmatprep.subr.mxu0 0.0
  %505 = vmatpush1.msra.mxu0 %v220
  %506 = vmatprep.subr.mxu0 0.0
  %507 = vmatpush1.msra.mxu0 0.0
  %508 = vmatprep.subr.mxu0 0.0
  %509 = vmatpush1.msra.mxu0 0.0
  %510 = vmatprep.subr.mxu0 0.0
  %511 = vmatpush1.msra.mxu0 0.0
  %512 = vmatprep.subr.mxu0 0.0
  %513 = vmatpush1.msra.mxu0 0.0
  %514 = vmatprep.subr.mxu0 0.0
  %515 = vmatpush1.msra.mxu0 0.0
  %516 = vmatprep.subr.mxu0 0.0
  %517 = vmatpush1.msra.mxu0 0.0
  %518 = vmatprep.subr.mxu0 0.0
  %519 = vmatpush1.msra.mxu0 0.0
  %520 = vmatprep.subr.mxu0 0.0
  %521 = vmatpush1.msra.mxu0 0.0
  %522 = vmatprep.subr.mxu0 0.0
  %523 = vmatpush1.msra.mxu0 0.0
  %524 = vmatprep.subr.mxu0 0.0
  %525 = vmatpush1.msra.mxu0 0.0
  %526 = vmatprep.subr.mxu0 0.0
  %527 = vmatpush1.msra.mxu0 0.0
  %528 = vmatprep.subr.mxu0 0.0
  %529 = vmatpush1.msra.mxu0 0.0
  %530 = vmatprep.subr.mxu0 0.0
  %531 = vmatpush1.msra.mxu0 0.0
  %532 = vmatprep.subr.mxu0 0.0
  %533 = vmatpush1.msra.mxu0 0.0
  %534 = vmatprep.subr.mxu0 0.0
  %535 = vmatpush1.msra.mxu0 0.0
  %536 = vmatprep.subr.mxu0 0.0
  %537 = vmatpush1.msra.mxu0 0.0
  %538 = vmatprep.subr.mxu0 0.0
  %539 = vmatpush1.msra.mxu0 0.0
  %540 = vmatprep.subr.mxu0 0.0
  %541 = vmatpush1.msra.mxu0 0.0
  %542 = vmatprep.subr.mxu0 0.0
  %543 = vmatpush1.msra.mxu0 0.0
  %544 = vmatprep.subr.mxu0 0.0
  %545 = vmatpush1.msra.mxu0 0.0
  %546 = vmatprep.subr.mxu0 0.0
  %547 = vmatpush1.msra.mxu0 0.0
  %548 = vmatprep.subr.mxu0 0.0
  %549 = vmatpush1.msra.mxu0 0.0
  %550 = vmatprep.subr.mxu0 0.0
  %551 = vmatpush1.msra.mxu0 0.0
  %552 = vmatprep.subr.mxu0 0.0
  %553 = vmatpush1.msra.mxu0 0.0
  %554 = vmatprep.subr.mxu0 0.0
  %555 = vmatpush1.msra.mxu0 0.0
  %556 = vmatprep.subr.mxu0 0.0
  %557 = vmatpush1.msra.mxu0 0.0
  %558 = vmatprep.subr.mxu0 0.0
  %559 = vmatpush1.msra.mxu0 0.0
  %560 = vmatprep.subr.mxu0 0.0
  %561 = vmatpush1.msra.mxu0 0.0
  %562 = vmatprep.subr.mxu0 0.0
  %563 = vmatpush1.msra.mxu0 0.0
  %564 = vmatprep.subr.mxu0 0.0
  %565 = vmatpush1.msra.mxu0 0.0
  %566 = vmatprep.subr.mxu0 0.0
  %567 = vmatpush1.msra.mxu0 0.0
  %568 = vmatprep.mubr.f32.mxu0 0.0
  %569 = vmatmul.mubr.f32.gmra.mrb[0].mxu0 %v481
  %v570 = vpop.f32.mrb[0].mxu0
  %v571 = vadd.f32 0.0, %v570
  %v572 = vpop.f32.mrb[0].mxu0
  %573 = vmatprep.mubr.f32.mxu0 0.0
  %574 = vmatmul.mubr.f32.gmra.mrb[0].mxu0 %v484
  %v575 = vpop.f32.mrb[0].mxu0
  %v576 = vadd.f32 0.0, %v575
  %v577 = vpop.f32.mrb[0].mxu0
  %578 = vmatprep.mubr.f32.mxu0 0.0
  %579 = vmatmul.mubr.f32.gmra.mrb[0].mxu0 %v487
  %v580 = vpop.f32.mrb[0].mxu0
  %v581 = vadd.f32 0.0, %v580
  %v582 = vpop.f32.mrb[0].mxu0
  %583 = vmatprep.mubr.f32.mxu0 0.0
  %584 = vmatmul.mubr.f32.gmra.mrb[0].mxu0 %v490
  %v585 = vpop.f32.mrb[0].mxu0
  %v586 = vadd.f32 0.0, %v585
  %v587 = vpop.f32.mrb[0].mxu0
  %588 = vmatprep.mubr.f32.mxu0 0.0
  %589 = vmatmul.mubr.f32.gmra.mrb[0].mxu0 %v493
  %v590 = vpop.f32.mrb[0].mxu0
  %v591 = vadd.f32 0.0, %v590
  %v592 = vpop.f32.mrb[0].mxu0
  %593 = vmatprep.mubr.f32.mxu0 0.0
  %594 = vmatmul.mubr.f32.gmra.mrb[0].mxu0 %v496
  %v595 = vpop.f32.mrb[0].mxu0
  %v596 = vadd.f32 0.0, %v595
  %v597 = vpop.f32.mrb[0].mxu0
  %598 = vmatprep.mubr.f32.mxu0 0.0
  %599 = vmatmul.mubr.f32.gmra.mrb[0].mxu0 %v499
  %v600 = vpop.f32.mrb[0].mxu0
  %v601 = vadd.f32 0.0, %v600
  %v602 = vpop.f32.mrb[0].mxu0
  %603 = vmatprep.mubr.f32.mxu0 0.0
  %604 = vmatmul.mubr.f32.gmra.mrb[0].mxu0 %v502
  %v605 = vpop.f32.mrb[0].mxu0
  %v606 = vadd.f32 0.0, %v605
  %v607 = vpop.f32.mrb[0].mxu0
  %608 = vdwg.mxu0
  %v610 = vsel %vm221, %v185, 0
  %v613 = vsel %vm221, %v186, 0
  %v616 = vsel %vm221, %v187, 0
  %v619 = vsel %vm221, %v188, 0
  %v622 = vsel %vm221, %v189, 0
  %v625 = vsel %vm221, %v190, 0
  %v628 = vsel %vm221, %v191, 0
  %v631 = vsel %vm221, %v192, 0
  %633 = vmatprep.subr.mxu0 0.0
  %634 = vmatpush1.msra.mxu0 %v216
  %635 = vmatprep.subr.mxu0 0.0
  %636 = vmatpush1.msra.mxu0 0.0
  %637 = vmatprep.subr.mxu0 0.0
  %638 = vmatpush1.msra.mxu0 0.0
  %639 = vmatprep.subr.mxu0 0.0
  %640 = vmatpush1.msra.mxu0 0.0
  %641 = vmatprep.subr.mxu0 0.0
  %642 = vmatpush1.msra.mxu0 0.0
  %643 = vmatprep.subr.mxu0 0.0
  %644 = vmatpush1.msra.mxu0 0.0
  %645 = vmatprep.subr.mxu0 0.0
  %646 = vmatpush1.msra.mxu0 0.0
  %647 = vmatprep.subr.mxu0 0.0
  %648 = vmatpush1.msra.mxu0 0.0
  %649 = vmatprep.subr.mxu0 0.0
  %650 = vmatpush1.msra.mxu0 0.0
  %651 = vmatprep.subr.mxu0 0.0
  %652 = vmatpush1.msra.mxu0 0.0
  %653 = vmatprep.subr.mxu0 0.0
  %654 = vmatpush1.msra.mxu0 0.0
  %655 = vmatprep.subr.mxu0 0.0
  %656 = vmatpush1.msra.mxu0 0.0
  %657 = vmatprep.subr.mxu0 0.0
  %658 = vmatpush1.msra.mxu0 0.0
  %659 = vmatprep.subr.mxu0 0.0
  %660 = vmatpush1.msra.mxu0 0.0
  %661 = vmatprep.subr.mxu0 0.0
  %662 = vmatpush1.msra.mxu0 0.0
  %663 = vmatprep.subr.mxu0 0.0
  %664 = vmatpush1.msra.mxu0 0.0
  %665 = vmatprep.subr.mxu0 0.0
  %666 = vmatpush1.msra.mxu0 0.0
  %667 = vmatprep.subr.mxu0 0.0
  %668 = vmatpush1.msra.mxu0 0.0
  %669 = vmatprep.subr.mxu0 0.0
  %670 = vmatpush1.msra.mxu0 0.0
  %671 = vmatprep.subr.mxu0 0.0
  %672 = vmatpush1.msra.mxu0 0.0
  %673 = vmatprep.subr.mxu0 0.0
  %674 = vmatpush1.msra.mxu0 0.0
  %675 = vmatprep.subr.mxu0 0.0
  %676 = vmatpush1.msra.mxu0 0.0
  %677 = vmatprep.subr.mxu0 0.0
  %678 = vmatpush1.msra.mxu0 0.0
  %679 = vmatprep.subr.mxu0 0.0
  %680 = vmatpush1.msra.mxu0 0.0
  %681 = vmatprep.subr.mxu0 0.0
  %682 = vmatpush1.msra.mxu0 0.0
  %683 = vmatprep.subr.mxu0 0.0
  %684 = vmatpush1.msra.mxu0 0.0
  %685 = vmatprep.subr.mxu0 0.0
  %686 = vmatpush1.msra.mxu0 0.0
  %687 = vmatprep.subr.mxu0 0.0
  %688 = vmatpush1.msra.mxu0 0.0
  %689 = vmatprep.subr.mxu0 0.0
  %690 = vmatpush1.msra.mxu0 0.0
  %691 = vmatprep.subr.mxu0 0.0
  %692 = vmatpush1.msra.mxu0 0.0
  %693 = vmatprep.subr.mxu0 0.0
  %694 = vmatpush1.msra.mxu0 0.0
  %695 = vmatprep.subr.mxu0 0.0
  %696 = vmatpush1.msra.mxu0 0.0
  %697 = vmatprep.mubr.f32.mxu0 0.0
  %698 = vmatmul.mubr.f32.gmra.mrb[0].mxu0 %v610
  %v699 = vpop.f32.mrb[0].mxu0
  %v700 = vadd.f32 %v571, %v699
  %v701 = vpop.f32.mrb[0].mxu0
  %702 = vmatprep.mubr.f32.mxu0 0.0
  %703 = vmatmul.mubr.f32.gmra.mrb[0].mxu0 %v613
  %v704 = vpop.f32.mrb[0].mxu0
  %v705 = vadd.f32 %v576, %v704
  %v706 = vpop.f32.mrb[0].mxu0
  %707 = vmatprep.mubr.f32.mxu0 0.0
  %708 = vmatmul.mubr.f32.gmra.mrb[0].mxu0 %v616
  %v709 = vpop.f32.mrb[0].mxu0
  %v710 = vadd.f32 %v581, %v709
  %v711 = vpop.f32.mrb[0].mxu0
  %712 = vmatprep.mubr.f32.mxu0 0.0
  %713 = vmatmul.mubr.f32.gmra.mrb[0].mxu0 %v619
  %v714 = vpop.f32.mrb[0].mxu0
  %v715 = vadd.f32 %v586, %v714
  %v716 = vpop.f32.mrb[0].mxu0
  %717 = vmatprep.mubr.f32.mxu0 0.0
  %718 = vmatmul.mubr.f32.gmra.mrb[0].mxu0 %v622
  %v719 = vpop.f32.mrb[0].mxu0
  %v720 = vadd.f32 %v591, %v719
  %v721 = vpop.f32.mrb[0].mxu0
  %722 = vmatprep.mubr.f32.mxu0 0.0
  %723 = vmatmul.mubr.f32.gmra.mrb[0].mxu0 %v625
  %v724 = vpop.f32.mrb[0].mxu0
  %v725 = vadd.f32 %v596, %v724
  %v726 = vpop.f32.mrb[0].mxu0
  %727 = vmatprep.mubr.f32.mxu0 0.0
  %728 = vmatmul.mubr.f32.gmra.mrb[0].mxu0 %v628
  %v729 = vpop.f32.mrb[0].mxu0
  %v730 = vadd.f32 %v601, %v729
  %v731 = vpop.f32.mrb[0].mxu0
  %732 = vmatprep.mubr.f32.mxu0 0.0
  %733 = vmatmul.mubr.f32.gmra.mrb[0].mxu0 %v631
  %v734 = vpop.f32.mrb[0].mxu0
  %v735 = vadd.f32 %v606, %v734
  %v736 = vpop.f32.mrb[0].mxu0
  %737 = vdwg.mxu0
  %v738 = vadd.s32 %v210, 8
  %v739 = vadd.s32 %v210, 16
  %v740 = vadd.s32 %v210, 24
  %v741 = vadd.s32 %v210, 32
  %v742 = vadd.s32 %v210, 40
  %v743 = vadd.s32 %v210, 48
  %v744 = vadd.s32 %v210, 56
  %v745 = vadd.s32 %v210, 64
  %v746 = vadd.s32 %v210, 72
  %v747 = vadd.s32 %v210, 80
  %v748 = vadd.s32 %v210, 88
  %v749 = vadd.s32 %v210, 96
  %v750 = vadd.s32 %v210, 104
  %v751 = vadd.s32 %v210, 112
  %v752 = vadd.s32 %v210, 120
  %v753 = vmul.u32 %v212, 2
  %vm754 = vcmp.eq.s32.totalorder %v210, %v753
  %vm755 = vcmp.eq.s32.totalorder %v738, %v753
  %vm756 = vcmp.eq.s32.totalorder %v739, %v753
  %vm757 = vcmp.eq.s32.totalorder %v740, %v753
  %vm758 = vcmp.eq.s32.totalorder %v741, %v753
  %vm759 = vcmp.eq.s32.totalorder %v742, %v753
  %vm760 = vcmp.eq.s32.totalorder %v743, %v753
  %vm761 = vcmp.eq.s32.totalorder %v744, %v753
  %vm762 = vcmp.eq.s32.totalorder %v745, %v753
  %vm763 = vcmp.eq.s32.totalorder %v746, %v753
  %vm764 = vcmp.eq.s32.totalorder %v747, %v753
  %vm765 = vcmp.eq.s32.totalorder %v748, %v753
  %vm766 = vcmp.eq.s32.totalorder %v749, %v753
  %vm767 = vcmp.eq.s32.totalorder %v750, %v753
  %vm768 = vcmp.eq.s32.totalorder %v751, %v753
  %vm769 = vcmp.eq.s32.totalorder %v752, %v753
  %v770 = vsel %vm754, 1, 0
  %v771 = vsel %vm755, 1, 0
  %v772 = vsel %vm756, 1, 0
  %v773 = vsel %vm757, 1, 0
  %v774 = vsel %vm758, 1, 0
  %v775 = vsel %vm759, 1, 0
  %v776 = vsel %vm760, 1, 0
  %v777 = vsel %vm761, 1, 0
  %v778 = vsel %vm762, 1, 0
  %v779 = vsel %vm763, 1, 0
  %v780 = vsel %vm764, 1, 0
  %v781 = vsel %vm765, 1, 0
  %v782 = vsel %vm766, 1, 0
  %v783 = vsel %vm767, 1, 0
  %v784 = vsel %vm768, 1, 0
  %v785 = vsel %vm769, 1, 0
  %v786 = vcvt.s32.f32 %v770
  %v787 = vcvt.s32.f32 %v771
  %v788 = vcvt.s32.f32 %v772
  %v789 = vcvt.s32.f32 %v773
  %v790 = vcvt.s32.f32 %v774
  %v791 = vcvt.s32.f32 %v775
  %v792 = vcvt.s32.f32 %v776
  %v793 = vcvt.s32.f32 %v777
  %v794 = vcvt.s32.f32 %v778
  %v795 = vcvt.s32.f32 %v779
  %v796 = vcvt.s32.f32 %v780
  %v797 = vcvt.s32.f32 %v781
  %v798 = vcvt.s32.f32 %v782
  %v799 = vcvt.s32.f32 %v783
  %v800 = vcvt.s32.f32 %v784
  %v801 = vcvt.s32.f32 %v785
  %v802 = vadd.s32 %v753, 1
  %vm803 = vcmp.eq.s32.totalorder %v210, %v802
  %vm804 = vcmp.eq.s32.totalorder %v738, %v802
  %vm805 = vcmp.eq.s32.totalorder %v739, %v802
  %vm806 = vcmp.eq.s32.totalorder %v740, %v802
  %vm807 = vcmp.eq.s32.totalorder %v741, %v802
  %vm808 = vcmp.eq.s32.totalorder %v742, %v802
  %vm809 = vcmp.eq.s32.totalorder %v743, %v802
  %vm810 = vcmp.eq.s32.totalorder %v744, %v802
  %vm811 = vcmp.eq.s32.totalorder %v745, %v802
  %vm812 = vcmp.eq.s32.totalorder %v746, %v802
  %vm813 = vcmp.eq.s32.totalorder %v747, %v802
  %vm814 = vcmp.eq.s32.totalorder %v748, %v802
  %vm815 = vcmp.eq.s32.totalorder %v749, %v802
  %vm816 = vcmp.eq.s32.totalorder %v750, %v802
  %vm817 = vcmp.eq.s32.totalorder %v751, %v802
  %vm818 = vcmp.eq.s32.totalorder %v752, %v802
  %v819 = vsel %vm803, 1, 0
  %v820 = vsel %vm804, 1, 0
  %v821 = vsel %vm805, 1, 0
  %v822 = vsel %vm806, 1, 0
  %v823 = vsel %vm807, 1, 0
  %v824 = vsel %vm808, 1, 0
  %v825 = vsel %vm809, 1, 0
  %v826 = vsel %vm810, 1, 0
  %v827 = vsel %vm811, 1, 0
  %v828 = vsel %vm812, 1, 0
  %v829 = vsel %vm813, 1, 0
  %v830 = vsel %vm814, 1, 0
  %v831 = vsel %vm815, 1, 0
  %v832 = vsel %vm816, 1, 0
  %v833 = vsel %vm817, 1, 0
  %v834 = vsel %vm818, 1, 0
  %v835 = vcvt.s32.f32 %v819
  %v836 = vcvt.s32.f32 %v820
  %v837 = vcvt.s32.f32 %v821
  %v838 = vcvt.s32.f32 %v822
  %v839 = vcvt.s32.f32 %v823
  %v840 = vcvt.s32.f32 %v824
  %v841 = vcvt.s32.f32 %v825
  %v842 = vcvt.s32.f32 %v826
  %v843 = vcvt.s32.f32 %v827
  %v844 = vcvt.s32.f32 %v828
  %v845 = vcvt.s32.f32 %v829
  %v846 = vcvt.s32.f32 %v830
  %v847 = vcvt.s32.f32 %v831
  %v848 = vcvt.s32.f32 %v832
  %v849 = vcvt.s32.f32 %v833
  %v850 = vcvt.s32.f32 %v834
  %vm851 = vcmask 523264
  %v853 = vsel %vm851, %v835, 0
  %v856 = vsel %vm851, %v836, 0
  %v859 = vsel %vm851, %v837, 0
  %v862 = vsel %vm851, %v838, 0
  %v865 = vsel %vm851, %v839, 0
  %v868 = vsel %vm851, %v840, 0
  %v871 = vsel %vm851, %v841, 0
  %v874 = vsel %vm851, %v842, 0
  %v877 = vsel %vm851, %v843, 0
  %v880 = vsel %vm851, %v844, 0
  %v883 = vsel %vm851, %v845, 0
  %v886 = vsel %vm851, %v846, 0
  %v889 = vsel %vm851, %v847, 0
  %v892 = vsel %vm851, %v848, 0
  %v895 = vsel %vm851, %v849, 0
  %v898 = vsel %vm851, %v850, 0
  %900 = vmatprep.subr.mxu0 0.0
  %901 = vmatpush1.msra.mxu0 %v700
  %902 = vmatprep.subr.mxu0 0.0
  %903 = vmatpush1.msra.mxu0 %v705
  %904 = vmatprep.subr.mxu0 0.0
  %905 = vmatpush1.msra.mxu0 %v710
  %906 = vmatprep.subr.mxu0 0.0
  %907 = vmatpush1.msra.mxu0 %v715
  %908 = vmatprep.subr.mxu0 0.0
  %909 = vmatpush1.msra.mxu0 %v720
  %910 = vmatprep.subr.mxu0 0.0
  %911 = vmatpush1.msra.mxu0 %v725
  %912 = vmatprep.subr.mxu0 0.0
  %913 = vmatpush1.msra.mxu0 %v730
  %914 = vmatprep.subr.mxu0 0.0
  %915 = vmatpush1.msra.mxu0 %v735
  %916 = vmatprep.subr.mxu0 0.0
  %917 = vmatpush1.msra.mxu0 0.0
  %918 = vmatprep.subr.mxu0 0.0
  %919 = vmatpush1.msra.mxu0 0.0
  %920 = vmatprep.subr.mxu0 0.0
  %921 = vmatpush1.msra.mxu0 0.0
  %922 = vmatprep.subr.mxu0 0.0
  %923 = vmatpush1.msra.mxu0 0.0
  %924 = vmatprep.subr.mxu0 0.0
  %925 = vmatpush1.msra.mxu0 0.0
  %926 = vmatprep.subr.mxu0 0.0
  %927 = vmatpush1.msra.mxu0 0.0
  %928 = vmatprep.subr.mxu0 0.0
  %929 = vmatpush1.msra.mxu0 0.0
  %930 = vmatprep.subr.mxu0 0.0
  %931 = vmatpush1.msra.mxu0 0.0
  %932 = vmatprep.subr.mxu0 0.0
  %933 = vmatpush1.msra.mxu0 0.0
  %934 = vmatprep.subr.mxu0 0.0
  %935 = vmatpush1.msra.mxu0 0.0
  %936 = vmatprep.subr.mxu0 0.0
  %937 = vmatpush1.msra.mxu0 0.0
  %938 = vmatprep.subr.mxu0 0.0
  %939 = vmatpush1.msra.mxu0 0.0
  %940 = vmatprep.subr.mxu0 0.0
  %941 = vmatpush1.msra.mxu0 0.0
  %942 = vmatprep.subr.mxu0 0.0
  %943 = vmatpush1.msra.mxu0 0.0
  %944 = vmatprep.subr.mxu0 0.0
  %945 = vmatpush1.msra.mxu0 0.0
  %946 = vmatprep.subr.mxu0 0.0
  %947 = vmatpush1.msra.mxu0 0.0
  %948 = vmatprep.subr.mxu0 0.0
  %949 = vmatpush1.msra.mxu0 0.0
  %950 = vmatprep.subr.mxu0 0.0
  %951 = vmatpush1.msra.mxu0 0.0
  %952 = vmatprep.subr.mxu0 0.0
  %953 = vmatpush1.msra.mxu0 0.0
  %954 = vmatprep.subr.mxu0 0.0
  %955 = vmatpush1.msra.mxu0 0.0
  %956 = vmatprep.subr.mxu0 0.0
  %957 = vmatpush1.msra.mxu0 0.0
  %958 = vmatprep.subr.mxu0 0.0
  %959 = vmatpush1.msra.mxu0 0.0
  %960 = vmatprep.subr.mxu0 0.0
  %961 = vmatpush1.msra.mxu0 0.0
  %962 = vmatprep.subr.mxu0 0.0
  %963 = vmatpush1.msra.mxu0 0.0
  %964 = vmatprep.mubr.f32.mxu0 0.0
  %965 = vmatmul.mubr.f32.gmra.mrb[0].mxu0 %v853
  %v966 = vpop.f32.mrb[0].mxu0
  %v967 = vadd.f32 0.0, %v966
  %v968 = vpop.f32.mrb[0].mxu0
  %969 = vmatprep.mubr.f32.mxu0 0.0
  %970 = vmatmul.mubr.f32.gmra.mrb[0].mxu0 %v856
  %v971 = vpop.f32.mrb[0].mxu0
  %v972 = vadd.f32 0.0, %v971
  %v973 = vpop.f32.mrb[0].mxu0
  %974 = vmatprep.mubr.f32.mxu0 0.0
  %975 = vmatmul.mubr.f32.gmra.mrb[0].mxu0 %v859
  %v976 = vpop.f32.mrb[0].mxu0
  %v977 = vadd.f32 0.0, %v976
  %v978 = vpop.f32.mrb[0].mxu0
  %979 = vmatprep.mubr.f32.mxu0 0.0
  %980 = vmatmul.mubr.f32.gmra.mrb[0].mxu0 %v862
  %v981 = vpop.f32.mrb[0].mxu0
  %v982 = vadd.f32 0.0, %v981
  %v983 = vpop.f32.mrb[0].mxu0
  %984 = vmatprep.mubr.f32.mxu0 0.0
  %985 = vmatmul.mubr.f32.gmra.mrb[0].mxu0 %v865
  %v986 = vpop.f32.mrb[0].mxu0
  %v987 = vadd.f32 0.0, %v986
  %v988 = vpop.f32.mrb[0].mxu0
  %989 = vmatprep.mubr.f32.mxu0 0.0
  %990 = vmatmul.mubr.f32.gmra.mrb[0].mxu0 %v868
  %v991 = vpop.f32.mrb[0].mxu0
  %v992 = vadd.f32 0.0, %v991
  %v993 = vpop.f32.mrb[0].mxu0
  %994 = vmatprep.mubr.f32.mxu0 0.0
  %995 = vmatmul.mubr.f32.gmra.mrb[0].mxu0 %v871
  %v996 = vpop.f32.mrb[0].mxu0
  %v997 = vadd.f32 0.0, %v996
  %v998 = vpop.f32.mrb[0].mxu0
  %999 = vmatprep.mubr.f32.mxu0 0.0
  %1000 = vmatmul.mubr.f32.gmra.mrb[0].mxu0 %v874
  %v1001 = vpop.f32.mrb[0].mxu0
  %v1002 = vadd.f32 0.0, %v1001
  %v1003 = vpop.f32.mrb[0].mxu0
  %1004 = vmatprep.mubr.f32.mxu0 0.0
  %1005 = vmatmul.mubr.f32.gmra.mrb[0].mxu0 %v877
  %v1006 = vpop.f32.mrb[0].mxu0
  %v1007 = vadd.f32 0.0, %v1006
  %v1008 = vpop.f32.mrb[0].mxu0
  %1009 = vmatprep.mubr.f32.mxu0 0.0
  %1010 = vmatmul.mubr.f32.gmra.mrb[0].mxu0 %v880
  %v1011 = vpop.f32.mrb[0].mxu0
  %v1012 = vadd.f32 0.0, %v1011
  %v1013 = vpop.f32.mrb[0].mxu0
  %1014 = vmatprep.mubr.f32.mxu0 0.0
  %1015 = vmatmul.mubr.f32.gmra.mrb[0].mxu0 %v883
  %v1016 = vpop.f32.mrb[0].mxu0
  %v1017 = vadd.f32 0.0, %v1016
  %v1018 = vpop.f32.mrb[0].mxu0
  %1019 = vmatprep.mubr.f32.mxu0 0.0
  %1020 = vmatmul.mubr.f32.gmra.mrb[0].mxu0 %v886
  %v1021 = vpop.f32.mrb[0].mxu0
  %v1022 = vadd.f32 0.0, %v1021
  %v1023 = vpop.f32.mrb[0].mxu0
  %1024 = vmatprep.mubr.f32.mxu0 0.0
  %1025 = vmatmul.mubr.f32.gmra.mrb[0].mxu0 %v889
  %v1026 = vpop.f32.mrb[0].mxu0
  %v1027 = vadd.f32 0.0, %v1026
  %v1028 = vpop.f32.mrb[0].mxu0
  %1029 = vmatprep.mubr.f32.mxu0 0.0
  %1030 = vmatmul.mubr.f32.gmra.mrb[0].mxu0 %v892
  %v1031 = vpop.f32.mrb[0].mxu0
  %v1032 = vadd.f32 0.0, %v1031
  %v1033 = vpop.f32.mrb[0].mxu0
  %1034 = vmatprep.mubr.f32.mxu0 0.0
  %1035 = vmatmul.mubr.f32.gmra.mrb[0].mxu0 %v895
  %v1036 = vpop.f32.mrb[0].mxu0
  %v1037 = vadd.f32 0.0, %v1036
  %v1038 = vpop.f32.mrb[0].mxu0
  %1039 = vmatprep.mubr.f32.mxu0 0.0
  %1040 = vmatmul.mubr.f32.gmra.mrb[0].mxu0 %v898
  %v1041 = vpop.f32.mrb[0].mxu0
  %v1042 = vadd.f32 0.0, %v1041
  %v1043 = vpop.f32.mrb[0].mxu0
  %1044 = vdwg.mxu0
  %v1046 = vsel %vm851, %v786, 0
  %v1049 = vsel %vm851, %v787, 0
  %v1052 = vsel %vm851, %v788, 0
  %v1055 = vsel %vm851, %v789, 0
  %v1058 = vsel %vm851, %v790, 0
  %v1061 = vsel %vm851, %v791, 0
  %v1064 = vsel %vm851, %v792, 0
  %v1067 = vsel %vm851, %v793, 0
  %v1070 = vsel %vm851, %v794, 0
  %v1073 = vsel %vm851, %v795, 0
  %v1076 = vsel %vm851, %v796, 0
  %v1079 = vsel %vm851, %v797, 0
  %v1082 = vsel %vm851, %v798, 0
  %v1085 = vsel %vm851, %v799, 0
  %v1088 = vsel %vm851, %v800, 0
  %v1091 = vsel %vm851, %v801, 0
  %1093 = vmatprep.subr.mxu0 0.0
  %1094 = vmatpush1.msra.mxu0 %v442
  %1095 = vmatprep.subr.mxu0 0.0
  %1096 = vmatpush1.msra.mxu0 %v447
  %1097 = vmatprep.subr.mxu0 0.0
  %1098 = vmatpush1.msra.mxu0 %v452
  %1099 = vmatprep.subr.mxu0 0.0
  %1100 = vmatpush1.msra.mxu0 %v457
  %1101 = vmatprep.subr.mxu0 0.0
  %1102 = vmatpush1.msra.mxu0 %v462
  %1103 = vmatprep.subr.mxu0 0.0
  %1104 = vmatpush1.msra.mxu0 %v467
  %1105 = vmatprep.subr.mxu0 0.0
  %1106 = vmatpush1.msra.mxu0 %v472
  %1107 = vmatprep.subr.mxu0 0.0
  %1108 = vmatpush1.msra.mxu0 %v477
  %1109 = vmatprep.subr.mxu0 0.0
  %1110 = vmatpush1.msra.mxu0 0.0
  %1111 = vmatprep.subr.mxu0 0.0
  %1112 = vmatpush1.msra.mxu0 0.0
  %1113 = vmatprep.subr.mxu0 0.0
  %1114 = vmatpush1.msra.mxu0 0.0
  %1115 = vmatprep.subr.mxu0 0.0
  %1116 = vmatpush1.msra.mxu0 0.0
  %1117 = vmatprep.subr.mxu0 0.0
  %1118 = vmatpush1.msra.mxu0 0.0
  %1119 = vmatprep.subr.mxu0 0.0
  %1120 = vmatpush1.msra.mxu0 0.0
  %1121 = vmatprep.subr.mxu0 0.0
  %1122 = vmatpush1.msra.mxu0 0.0
  %1123 = vmatprep.subr.mxu0 0.0
  %1124 = vmatpush1.msra.mxu0 0.0
  %1125 = vmatprep.subr.mxu0 0.0
  %1126 = vmatpush1.msra.mxu0 0.0
  %1127 = vmatprep.subr.mxu0 0.0
  %1128 = vmatpush1.msra.mxu0 0.0
  %1129 = vmatprep.subr.mxu0 0.0
  %1130 = vmatpush1.msra.mxu0 0.0
  %1131 = vmatprep.subr.mxu0 0.0
  %1132 = vmatpush1.msra.mxu0 0.0
  %1133 = vmatprep.subr.mxu0 0.0
  %1134 = vmatpush1.msra.mxu0 0.0
  %1135 = vmatprep.subr.mxu0 0.0
  %1136 = vmatpush1.msra.mxu0 0.0
  %1137 = vmatprep.subr.mxu0 0.0
  %1138 = vmatpush1.msra.mxu0 0.0
  %1139 = vmatprep.subr.mxu0 0.0
  %1140 = vmatpush1.msra.mxu0 0.0
  %1141 = vmatprep.subr.mxu0 0.0
  %1142 = vmatpush1.msra.mxu0 0.0
  %1143 = vmatprep.subr.mxu0 0.0
  %1144 = vmatpush1.msra.mxu0 0.0
  %1145 = vmatprep.subr.mxu0 0.0
  %1146 = vmatpush1.msra.mxu0 0.0
  %1147 = vmatprep.subr.mxu0 0.0
  %1148 = vmatpush1.msra.mxu0 0.0
  %1149 = vmatprep.subr.mxu0 0.0
  %1150 = vmatpush1.msra.mxu0 0.0
  %1151 = vmatprep.subr.mxu0 0.0
  %1152 = vmatpush1.msra.mxu0 0.0
  %1153 = vmatprep.subr.mxu0 0.0
  %1154 = vmatpush1.msra.mxu0 0.0
  %1155 = vmatprep.subr.mxu0 0.0
  %1156 = vmatpush1.msra.mxu0 0.0
  %1157 = vmatprep.mubr.f32.mxu0 0.0
  %1158 = vmatmul.mubr.f32.gmra.mrb[0].mxu0 %v1046
  %v1159 = vpop.f32.mrb[0].mxu0
  %v1160 = vadd.f32 %v967, %v1159
  %v1161 = vpop.f32.mrb[0].mxu0
  %1162 = vmatprep.mubr.f32.mxu0 0.0
  %1163 = vmatmul.mubr.f32.gmra.mrb[0].mxu0 %v1049
  %v1164 = vpop.f32.mrb[0].mxu0
  %v1165 = vadd.f32 %v972, %v1164
  %v1166 = vpop.f32.mrb[0].mxu0
  %1167 = vmatprep.mubr.f32.mxu0 0.0
  %1168 = vmatmul.mubr.f32.gmra.mrb[0].mxu0 %v1052
  %v1169 = vpop.f32.mrb[0].mxu0
  %v1170 = vadd.f32 %v977, %v1169
  %v1171 = vpop.f32.mrb[0].mxu0
  %1172 = vmatprep.mubr.f32.mxu0 0.0
  %1173 = vmatmul.mubr.f32.gmra.mrb[0].mxu0 %v1055
  %v1174 = vpop.f32.mrb[0].mxu0
  %v1175 = vadd.f32 %v982, %v1174
  %v1176 = vpop.f32.mrb[0].mxu0
  %1177 = vmatprep.mubr.f32.mxu0 0.0
  %1178 = vmatmul.mubr.f32.gmra.mrb[0].mxu0 %v1058
  %v1179 = vpop.f32.mrb[0].mxu0
  %v1180 = vadd.f32 %v987, %v1179
  %v1181 = vpop.f32.mrb[0].mxu0
  %1182 = vmatprep.mubr.f32.mxu0 0.0
  %1183 = vmatmul.mubr.f32.gmra.mrb[0].mxu0 %v1061
  %v1184 = vpop.f32.mrb[0].mxu0
  %v1185 = vadd.f32 %v992, %v1184
  %v1186 = vpop.f32.mrb[0].mxu0
  %1187 = vmatprep.mubr.f32.mxu0 0.0
  %1188 = vmatmul.mubr.f32.gmra.mrb[0].mxu0 %v1064
  %v1189 = vpop.f32.mrb[0].mxu0
  %v1190 = vadd.f32 %v997, %v1189
  %v1191 = vpop.f32.mrb[0].mxu0
  %1192 = vmatprep.mubr.f32.mxu0 0.0
  %1193 = vmatmul.mubr.f32.gmra.mrb[0].mxu0 %v1067
  %v1194 = vpop.f32.mrb[0].mxu0
  %v1195 = vadd.f32 %v1002, %v1194
  %v1196 = vpop.f32.mrb[0].mxu0
  %1197 = vmatprep.mubr.f32.mxu0 0.0
  %1198 = vmatmul.mubr.f32.gmra.mrb[0].mxu0 %v1070
  %v1199 = vpop.f32.mrb[0].mxu0
  %v1200 = vadd.f32 %v1007, %v1199
  %v1201 = vpop.f32.mrb[0].mxu0
  %1202 = vmatprep.mubr.f32.mxu0 0.0
  %1203 = vmatmul.mubr.f32.gmra.mrb[0].mxu0 %v1073
  %v1204 = vpop.f32.mrb[0].mxu0
  %v1205 = vadd.f32 %v1012, %v1204
  %v1206 = vpop.f32.mrb[0].mxu0
  %1207 = vmatprep.mubr.f32.mxu0 0.0
  %1208 = vmatmul.mubr.f32.gmra.mrb[0].mxu0 %v1076
  %v1209 = vpop.f32.mrb[0].mxu0
  %v1210 = vadd.f32 %v1017, %v1209
  %v1211 = vpop.f32.mrb[0].mxu0
  %1212 = vmatprep.mubr.f32.mxu0 0.0
  %1213 = vmatmul.mubr.f32.gmra.mrb[0].mxu0 %v1079
  %v1214 = vpop.f32.mrb[0].mxu0
  %v1215 = vadd.f32 %v1022, %v1214
  %v1216 = vpop.f32.mrb[0].mxu0
  %1217 = vmatprep.mubr.f32.mxu0 0.0
  %1218 = vmatmul.mubr.f32.gmra.mrb[0].mxu0 %v1082
  %v1219 = vpop.f32.mrb[0].mxu0
  %v1220 = vadd.f32 %v1027, %v1219
  %v1221 = vpop.f32.mrb[0].mxu0
  %1222 = vmatprep.mubr.f32.mxu0 0.0
  %1223 = vmatmul.mubr.f32.gmra.mrb[0].mxu0 %v1085
  %v1224 = vpop.f32.mrb[0].mxu0
  %v1225 = vadd.f32 %v1032, %v1224
  %v1226 = vpop.f32.mrb[0].mxu0
  %1227 = vmatprep.mubr.f32.mxu0 0.0
  %1228 = vmatmul.mubr.f32.gmra.mrb[0].mxu0 %v1088
  %v1229 = vpop.f32.mrb[0].mxu0
  %v1230 = vadd.f32 %v1037, %v1229
  %v1231 = vpop.f32.mrb[0].mxu0
  %1232 = vmatprep.mubr.f32.mxu0 0.0
  %1233 = vmatmul.mubr.f32.gmra.mrb[0].mxu0 %v1091
  %v1234 = vpop.f32.mrb[0].mxu0
  %v1235 = vadd.f32 %v1042, %v1234
  %v1236 = vpop.f32.mrb[0].mxu0
  %1237 = vdwg.mxu0
  %vm1238 = vcmask 130048
  %1239 = vst.msk [vmem:[%s4] sm:$0xff] %vm1238, %v1160
  %1240 = vst.msk [vmem:[%s4 + $0x8] sm:$0xff] %vm1238, %v1165
  %1241 = vst.msk [vmem:[%s4 + $0x10] sm:$0xff] %vm1238, %v1170
  %1242 = vst.msk [vmem:[%s4 + $0x18] sm:$0xff] %vm1238, %v1175
  %1243 = vst.msk [vmem:[%s4 + $0x20] sm:$0xff] %vm1238, %v1180
  %1244 = vst.msk [vmem:[%s4 + $0x28] sm:$0xff] %vm1238, %v1185
  %1245 = vst.msk [vmem:[%s4 + $0x30] sm:$0xff] %vm1238, %v1190
  %1246 = vst.msk [vmem:[%s4 + $0x38] sm:$0xff] %vm1238, %v1195
  %1247 = vst.msk [vmem:[%s4 + $0x40] sm:$0xff] %vm1238, %v1200
  %1248 = vst.msk [vmem:[%s4 + $0x48] sm:$0xff] %vm1238, %v1205
  %1249 = vst.msk [vmem:[%s4 + $0x50] sm:$0xff] %vm1238, %v1210
  %1250 = vst.msk [vmem:[%s4 + $0x58] sm:$0xff] %vm1238, %v1215
  %1251 = vst.msk [vmem:[%s4 + $0x60] sm:$0xff] %vm1238, %v1220
  %1252 = vst.msk [vmem:[%s4 + $0x68] sm:$0xff] %vm1238, %v1225
  %1253 = vst.msk [vmem:[%s4 + $0x70] sm:$0xff] %vm1238, %v1230
  %1254 = vst.msk [vmem:[%s4 + $0x78] sm:$0xff] %vm1238, %v1235
  // Predicated region
  $region18: #{tpu_custom_call.1} parent=0 // pred_check
    _
  $region19: #{tpu_custom_call.1} parent=0 // pred_check_branch
    %1256 = sbr.rel (0) target = $region21
  $region20: #{tpu_custom_call.1} parent=0 // pred_region
    _
  $region21: #{tpu_custom_call.1} parent=0 // pred_fallthru
    _
  // Predicated region
  $region22: #{tpu_custom_call.1} parent=0 // pred_check
    _
  $region23: #{tpu_custom_call.1} parent=0 // pred_check_branch
    %1258 = sbr.rel (0) target = $region25
  $region24: #{tpu_custom_call.1} parent=0 // pred_region
    _
  $region25: #{tpu_custom_call.1} parent=0 // pred_fallthru
    _

</llo_original>
